<compile_context>
chip_gen: v5e
topology: v5e:2x2
jax: 0.10.0
libtpu: 0.0.40
codegen_flags: <defaults>
</compile_context>

<pallas_src>
import jax
import jax.numpy as jnp
from jax.experimental import pallas as pl
from jax.experimental.pallas import tpu as pltpu


def _round_up(x, m):
    return ((x + m - 1) // m) * m


# ---------------------------------------------------------------------------
# Path A kernel: full K resident per tile -> single fused matmul + bias add.
#   x_ref: (tm, K)   w_ref: (K, tn)   b_ref: (1, tn)   o_ref: (tm, tn)
# ---------------------------------------------------------------------------
def _linear_kernel(x_ref, w_ref, b_ref, o_ref):
    acc = jnp.dot(x_ref[...], w_ref[...], preferred_element_type=jnp.float32)
    o_ref[...] = (acc + b_ref[...]).astype(o_ref.dtype)


# ---------------------------------------------------------------------------
# Path B kernel: K-tiled accumulation in a VMEM scratch (huge-K fallback).
#   x_ref: (tm, tk)  w_ref: (tk, tn)  b_ref: (1, tn)  o_ref/acc_ref: (tm, tn)
# ---------------------------------------------------------------------------
def _linear_acc_kernel(x_ref, w_ref, b_ref, o_ref, acc_ref):
    k = pl.program_id(2)

    @pl.when(k == 0)
    def _init():
        # Bias folded into the accumulator init -> finalize is a pure cast.
        acc_ref[...] = jnp.broadcast_to(b_ref[...], acc_ref.shape)

    acc_ref[...] += jnp.dot(x_ref[...], w_ref[...],
                            preferred_element_type=jnp.float32)

    @pl.when(k == pl.num_programs(2) - 1)
    def _fin():
        o_ref[...] = acc_ref[...].astype(o_ref.dtype)


def linear_classifier_forward(x, weight, bias, *,
                              tm_max=512, tn_max=1024, tk_max=2048,
                              vmem_budget_bytes=None):
    """Pallas-TPU forward of LinearClassifier: x.view(B, -1) @ weight.T + bias.

    x:      (B, ...)             (flattened like torch's .view(B, -1))
    weight: (num_labels, dim)
    bias:   (num_labels,)
    Returns (B, num_labels) float32.
    """
    B = x.shape[0]
    x2d = x.reshape(B, -1)                 # keep native dtype (bf16 streams half the bytes)
    M, K = x2d.shape
    N, Kw = weight.shape
    assert Kw == K, f"weight dim {Kw} != flattened feature dim {K}"

    isx = jnp.dtype(x2d.dtype).itemsize
    isw = jnp.dtype(weight.dtype).itemsize
    sub_m = {1: 32, 2: 16, 4: 8}.get(isx, 8)     # sublane multiple for x's dtype

    K128 = _round_up(K, 128)
    N128 = _round_up(N, 128)
    M_rows = max(M, sub_m)                       # need at least one sublane tile of rows
    tm_cap = (M_rows // sub_m) * sub_m           # largest block that fits inside the array
    tm_max_r = max(sub_m, _round_up(tm_max, sub_m))

    bias2d = bias.astype(jnp.float32).reshape(1, N)
    if N128 != N:
        bias2d = jnp.pad(bias2d, ((0, 0), (0, N128 - N)))

    # ---- generation-aware VMEM budget (v7x: 64 MiB/TC, v5e/v6e: 128 MiB) ----
    if vmem_budget_bytes is None:
        try:
            vmem_cap = int(pltpu.get_tpu_info().vmem_capacity_bytes)
        except Exception:
            vmem_cap = 64 << 20                  # conservative default (v7x per-TC)
        budget = vmem_cap // 2                   # tile footprint incl. double buffering
    else:
        budget = int(vmem_budget_bytes)
        vmem_cap = 64 << 20
    vmem_limit_cap = max(32 << 20, vmem_cap - (8 << 20))

    def _vmem_limit(footprint):
        return int(min(max(32 << 20, footprint + (8 << 20)), vmem_limit_cap))

    def _megacore_cap(tm):
        # v7x has 2 TensorCores: give the "parallel" M axis >= 2 blocks whenever
        # there is enough work to split (harmless on single-TC v5e/v6e).
        if M_rows > sub_m and tm * 2 > M_rows:
            tm = min(tm, max(sub_m, _round_up((M_rows + 1) // 2, sub_m)))
        return tm

    # ------------------------------------------------------------------
    # Path A: full-K residency, 2-D (M, N) grid, no accumulator.
    # ------------------------------------------------------------------
    def _path_a_tiles():
        tn = min(_round_up(tn_max, 128), N128)
        while True:
            w_fixed = 2 * K128 * tn * isw + 2 * tn * 4   # W slab + bias (double-buffered)
            row_b = 2 * K128 * isx + 2 * tn * 4          # x row + out row (double-buffered)
            tm = (budget - w_fixed) // max(row_b, 1)
            tm = min((tm // sub_m) * sub_m, tm_max_r, tm_cap)
            if tm >= sub_m and (tm >= min(128, tm_cap) or tn <= 128):
                return _megacore_cap(tm), tn
            if tn <= 128:
                return None
            tn = max(128, (tn // 2) // 128 * 128)

    tiles_a = _path_a_tiles()
    if tiles_a is not None:
        tm, tn = tiles_a

        # Pad x only where strictly required: K remainder must be exactly zero
        # (it multiplies into valid outputs); extra rows only when M is smaller
        # than one sublane tile.  M remainders at block boundaries need no pad
        # (out-of-bounds output rows are clipped on write-back).
        if M_rows != M or K128 != K:
            x_in = jnp.pad(x2d, ((0, M_rows - M), (0, K128 - K)))
        else:
            x_in = x2d
        wt = weight.T                                    # (K, N): one tiny pass over W
        if K128 != K or N128 != N:
            wt = jnp.pad(wt, ((0, K128 - K), (0, N128 - N)))

        grid = (pl.cdiv(M_rows, tm), pl.cdiv(N128, tn))
        footprint = (2 * tm * K128 * isx + 2 * K128 * tn * isw
                     + 2 * tn * 4 + 2 * tm * tn * 4)
        w_streams = 1 if grid[1] == 1 else grid[0] * grid[1]
        cost = pl.CostEstimate(
            flops=2 * M_rows * N128 * K128,
            transcendentals=0,
            bytes_accessed=(isx * M_rows * K128 + isw * w_streams * K128 * tn
                            + 4 * M_rows * N128 + 4 * N128),
        )

        out = pl.pallas_call(
            _linear_kernel,
            out_shape=jax.ShapeDtypeStruct((M_rows, N128), jnp.float32),
            grid=grid,
            in_specs=[
                pl.BlockSpec((tm, K128), lambda i, j: (i, 0)),   # x: streamed exactly once
                pl.BlockSpec((K128, tn), lambda i, j: (0, j)),   # W: resident per N tile
                pl.BlockSpec((1, tn), lambda i, j: (0, j)),      # bias
            ],
            out_specs=pl.BlockSpec((tm, tn), lambda i, j: (i, j)),
            compiler_params=pltpu.CompilerParams(
                dimension_semantics=("parallel", "parallel"),
                vmem_limit_bytes=_vmem_limit(footprint),
            ),
            cost_estimate=cost,
        )(x_in, wt, bias2d)
        return out[:M, :N]

    # ------------------------------------------------------------------
    # Path B: K-tiled accumulator (only when a full-K weight slab cannot be
    # kept resident).  With >1 M block the (tk, tn) weight tiles are
    # re-streamed once per M block — acceptable for this rare fallback.
    # ------------------------------------------------------------------
    tn = min(_round_up(min(tn_max, 512), 128), N128)
    tk = min(_round_up(tk_max, 128), K128)
    while tk > 128 and 2 * tk * tn * isw > max(budget // 3, 1):
        tk = max(128, (tk // 2) // 128 * 128)
    w_fixed = 2 * tk * tn * isw + 2 * tn * 4
    row_b = 2 * tk * isx + 3 * tn * 4                    # x row + out row (dbl) + acc row
    tm = (budget - w_fixed) // max(row_b, 1)
    tm = max(sub_m, min((tm // sub_m) * sub_m, tm_max_r, tm_cap))
    tm = _megacore_cap(tm)

    K_pad = _round_up(K, tk)                             # K tiles must be exactly zero-padded
    if M_rows != M or K_pad != K:
        x_in = jnp.pad(x2d, ((0, M_rows - M), (0, K_pad - K)))
    else:
        x_in = x2d
    wt = weight.T
    if K_pad != K or N128 != N:
        wt = jnp.pad(wt, ((0, K_pad - K), (0, N128 - N)))

    grid = (pl.cdiv(M_rows, tm), pl.cdiv(N128, tn), K_pad // tk)
    footprint = (2 * tm * tk * isx + 2 * tk * tn * isw + 2 * tn * 4
                 + 2 * tm * tn * 4 + tm * tn * 4)
    cost = pl.CostEstimate(
        flops=2 * M_rows * N128 * K_pad,
        transcendentals=0,
        bytes_accessed=(isx * M_rows * K_pad + isw * grid[0] * K_pad * N128
                        + 4 * M_rows * N128 + 4 * N128),
    )

    out = pl.pallas_call(
        _linear_acc_kernel,
        out_shape=jax.ShapeDtypeStruct((M_rows, N128), jnp.float32),
        grid_spec=pltpu.PrefetchScalarGridSpec(
            num_scalar_prefetch=0,
            grid=grid,
            in_specs=[
                pl.BlockSpec((tm, tk), lambda i, j, k: (i, k)),
                pl.BlockSpec((tk, tn), lambda i, j, k: (k, j)),
                pl.BlockSpec((1, tn), lambda i, j, k: (0, j)),
            ],
            out_specs=pl.BlockSpec((tm, tn), lambda i, j, k: (i, j)),
            scratch_shapes=[pltpu.VMEM((tm, tn), jnp.float32)],
        ),
        compiler_params=pltpu.CompilerParams(
            dimension_semantics=("parallel", "parallel", "arbitrary"),
            vmem_limit_bytes=_vmem_limit(footprint),
        ),
        cost_estimate=cost,
    )(x_in, wt, bias2d)
    return out[:M, :N]


if __name__ == "__main__":
    # Small shapes consistent with the module: B=8, C=4, H=W=8 -> dim=256,
    # num_labels=10 (exercises the non-multiple-of-128 output padding).
    B, C, H, W = 8, 4, 8, 8
    dim = C * H * W
    num_labels = 10

    key = jax.random.PRNGKey(0)
    kx, kw = jax.random.split(key)

    x = jax.random.normal(kx, (B, C, H, W), dtype=jnp.float32)
    # nn.Linear init as in the module: weight ~ N(0, 0.01), bias = 0.
    weight = 0.01 * jax.random.normal(kw, (num_labels, dim), dtype=jnp.float32)
    bias = jnp.zeros((num_labels,), dtype=jnp.float32)

    ref = x.reshape(B, -1) @ weight.T + bias

    # Main path: full-K-resident 2-D grid (x streamed once, W fetched once).
    out = jax.block_until_ready(linear_classifier_forward(x, weight, bias))
    assert out.shape == (B, num_labels)
    assert jnp.allclose(out, ref, atol=1e-4, rtol=1e-4)

    # Force the K-tiled accumulator fallback (tiny budget -> 2 K steps).
    out_kt = jax.block_until_ready(
        linear_classifier_forward(x, weight, bias, vmem_budget_bytes=0, tk_max=128))
    assert out_kt.shape == (B, num_labels)
    assert jnp.allclose(out_kt, ref, atol=1e-4, rtol=1e-4)

    # bf16 inputs stream at half the HBM bytes; accumulation stays f32.
    out_bf16 = jax.block_until_ready(
        linear_classifier_forward(x.astype(jnp.bfloat16),
                                  weight.astype(jnp.bfloat16), bias))
    assert out_bf16.shape == (B, num_labels)
    assert jnp.allclose(out_bf16, ref, atol=5e-2, rtol=5e-2)

    print("KERNEL_OK")
</pallas_src>

<mosaic_0001>
module attributes {stable_mosaic.version = 11 : i64} {
  func.func @_linear_kernel(%arg0: i32, %arg1: i32, %arg2: memref<8x256xf32, #tpu.memory_space<vmem>>, %arg3: memref<256x128xf32, #tpu.memory_space<vmem>>, %arg4: memref<1x128xf32, #tpu.memory_space<vmem>>, %arg5: memref<8x128xf32, #tpu.memory_space<vmem>>) attributes {dimension_semantics = [#tpu.dimension_semantics<parallel>, #tpu.dimension_semantics<parallel>], iteration_bounds = array<i64: 1, 1>, scalar_prefetch = 0 : i64, scratch_operands = 0 : i64, tpu.core_type = #tpu.core_type<tc>, window_params = [{transform_indices = @transform_0, window_bounds = array<i64: 8, 256>}, {transform_indices = @transform_1, window_bounds = array<i64: 256, 128>}, {transform_indices = @transform_2, window_bounds = array<i64: 1, 128>}, {transform_indices = @transform_3, window_bounds = array<i64: 8, 128>}]} {
    %c0 = arith.constant 0 : index
    %c0_0 = arith.constant 0 : index
    %0 = vector.load %arg2[%c0, %c0_0] : memref<8x256xf32, #tpu.memory_space<vmem>>, vector<8x256xf32>
    %c0_1 = arith.constant 0 : index
    %c0_2 = arith.constant 0 : index
    %1 = vector.load %arg3[%c0_1, %c0_2] : memref<256x128xf32, #tpu.memory_space<vmem>>, vector<256x128xf32>
    %cst = arith.constant dense<0.000000e+00> : vector<8x128xf32>
    %2 = tpu.matmul %0, %1, %cst {dimension_numbers = #tpu.dot_dimension_numbers<[1], [0], [0], [1], [0, 0, 1, 1], [], []>} : vector<8x256xf32>, vector<256x128xf32>, vector<8x128xf32> -> vector<8x128xf32>
    %c0_3 = arith.constant 0 : index
    %c0_4 = arith.constant 0 : index
    %3 = vector.load %arg4[%c0_3, %c0_4] : memref<1x128xf32, #tpu.memory_space<vmem>>, vector<1x128xf32>
    %4 = vector.broadcast %3 : vector<1x128xf32> to vector<8x128xf32>
    %5 = arith.addf %2, %4 : vector<8x128xf32>
    %c0_5 = arith.constant 0 : index
    %c0_6 = arith.constant 0 : index
    %6 = vector.load %arg5[%c0_5, %c0_6] : memref<8x128xf32, #tpu.memory_space<vmem>>, vector<8x128xf32>
    tpu.vector_store %arg5[%c0_5, %c0_6], %5 {strides = array<i32>} : memref<8x128xf32, #tpu.memory_space<vmem>>, vector<8x128xf32>,
    return
  }
  func.func @transform_0(%arg0: i32, %arg1: i32) -> (i32, i32) {
    %c0_i32 = arith.constant 0 : i32
    %c0_i32_0 = arith.constant 0 : i32
    return %arg0, %c0_i32 : i32, i32
  }
  func.func @transform_1(%arg0: i32, %arg1: i32) -> (i32, i32) {
    %c0_i32 = arith.constant 0 : i32
    %c0_i32_0 = arith.constant 0 : i32
    return %c0_i32, %arg1 : i32, i32
  }
  func.func @transform_2(%arg0: i32, %arg1: i32) -> (i32, i32) {
    %c0_i32 = arith.constant 0 : i32
    %c0_i32_0 = arith.constant 0 : i32
    return %c0_i32, %arg1 : i32, i32
  }
  func.func @transform_3(%arg0: i32, %arg1: i32) -> (i32, i32) {
    %c0_i32 = arith.constant 0 : i32
    return %arg0, %arg1 : i32, i32
  }
}

</mosaic_0001>

<llo_original>
// kernel: tpu_custom_call.1
$region0: #{tpu_custom_call.1}
  #allocation0 [shape = 'u32[]', space=smem, size = 0x4, offset = 0x4, fixed_abs, tag = 'smem constant byte address 0x4 - core index']
  #allocation1 [shape = 'u32[72,128]{1,0:T(1,128)}', space=vmem, size = 0x9000, scoped, tag = 'internal scratch']
  %s0 = inlined_call_operand.hbm [shape: f32[8,256], index: 0, kind: input, shape index: {}]
  %s1 = inlined_call_operand.hbm [shape: f32[256,128], index: 1, kind: input, shape index: {}]
  %s2 = inlined_call_operand.vmem [shape: f32[1,128], index: 2, kind: input, shape index: {}]
  %s3 = inlined_call_operand.hbm [shape: f32[8,128], index: 3, kind: output, shape index: {}]
  %s4 = sld [smem:[#allocation0]]
  $region30: #{tpu_custom_call.1} parent=0
    _
  %s6 = ssub.s32 1, %s4
  %s7 = scalar_select 0, %s6, %s4
  $region1: #{tpu_custom_call.1} parent=0
    #allocation2 [shape = 'u8[8192]{0}', space=vmem, size = 0x2000, scoped, tag = 'input window, operand 0, single buffered']
    #allocation3 [shape = 's32[1]{0}', space=sflag, size = 0x4, scoped, tag = 'scoped memory for tpu_custom_call.1']
    #allocation4 [shape = 's32[1]{0}', space=sflag, size = 0x4, scoped, tag = 'scoped memory for tpu_custom_call.1']
    #allocation5 [shape = 'u8[131072]{0}', space=vmem, size = 0x20000, scoped, tag = 'input window, operand 1, single buffered']
    #allocation6 [shape = 's32[1]{0}', space=sflag, size = 0x4, scoped, tag = 'scoped memory for tpu_custom_call.1']
    #allocation7 [shape = 'u8[4096]{0}', space=vmem, size = 0x1000, scoped, tag = 'output window, operand 0, single buffered']
    %8 = vsyncpa [#allocation3], 0
    %9 = vsyncpa [#allocation6], 0
    %10 = vsyncpa [#allocation4], 0
    // Predicated region
    $region2: #{tpu_custom_call.1} parent=1 // pred_check
      _
    $region3: #{tpu_custom_call.1} parent=1 // pred_check_branch
      %12 = sbr.rel (0) target = $region5
    $region4: #{tpu_custom_call.1} parent=1 // pred_region
      %14 = vsyncadd [#allocation3], 0
      %s16 = sshll.u32 %s0, 4
      %s17 = int_to_ptr.hbm [resolvable:$true] %s16
      %s18 = sshll.u32 [#allocation2], 4
      %s19 = int_to_ptr.vmem [resolvable:$true] %s18
      %21 = dma.hbm_to_vmem [thread:$0]  %s17, 256, %s19, [#allocation3]
    $region5: #{tpu_custom_call.1} parent=1 // pred_fallthru
      _
    // Predicated region
    $region6: #{tpu_custom_call.1} parent=1 // pred_check
      _
    $region7: #{tpu_custom_call.1} parent=1 // pred_check_branch
      %23 = sbr.rel (0) target = $region9
    $region8: #{tpu_custom_call.1} parent=1 // pred_region
      %25 = vsyncadd [#allocation6], 0
      %s26 = sshll.u32 %s1, 4
      %s27 = int_to_ptr.hbm [resolvable:$true] %s26
      %s28 = sshll.u32 [#allocation5], 4
      %s29 = int_to_ptr.vmem [resolvable:$true] %s28
      %34 = dma.hbm_to_vmem [thread:$0]  %s27, 4096, %s29, [#allocation6], 128, 128, 8
    $region9: #{tpu_custom_call.1} parent=1 // pred_fallthru
      _
    // Predicated region
    $region10: #{tpu_custom_call.1} parent=1 // pred_check
      _
    $region11: #{tpu_custom_call.1} parent=1 // pred_check_branch
      %36 = sbr.rel (0) target = $region13
    $region12: #{tpu_custom_call.1} parent=1 // pred_region
      _
    $region13: #{tpu_custom_call.1} parent=1 // pred_fallthru
      _
    // Predicated region
    $region14: #{tpu_custom_call.1} parent=1 // pred_check
      _
    $region15: #{tpu_custom_call.1} parent=1 // pred_check_branch
      %38 = sbr.rel (0) target = $region17
    $region16: #{tpu_custom_call.1} parent=1 // pred_region
      %40 = dma.done [#allocation3], 256
    $region17: #{tpu_custom_call.1} parent=1 // pred_fallthru
      _
    // Predicated region
    $region18: #{tpu_custom_call.1} parent=1 // pred_check
      _
    $region19: #{tpu_custom_call.1} parent=1 // pred_check_branch
      %42 = sbr.rel (0) target = $region21
    $region20: #{tpu_custom_call.1} parent=1 // pred_region
      %44 = dma.done [#allocation6], 4096
    $region21: #{tpu_custom_call.1} parent=1 // pred_fallthru
      _
    %v45 = vld [vmem:[#allocation2] sm:$0xff]
    %v46 = vld [vmem:[#allocation2 + $0x8] sm:$0xff]
    %v47 = vld [vmem:[#allocation5] sm:$0xff]
    %v48 = vld [vmem:[#allocation5 + $0x8] sm:$0xff]
    %v49 = vld [vmem:[#allocation5 + $0x10] sm:$0xff]
    %v50 = vld [vmem:[#allocation5 + $0x18] sm:$0xff]
    %v51 = vld [vmem:[#allocation5 + $0x20] sm:$0xff]
    %v52 = vld [vmem:[#allocation5 + $0x28] sm:$0xff]
    %v53 = vld [vmem:[#allocation5 + $0x30] sm:$0xff]
    %v54 = vld [vmem:[#allocation5 + $0x38] sm:$0xff]
    %v55 = vld [vmem:[#allocation5 + $0x40] sm:$0xff]
    %v56 = vld [vmem:[#allocation5 + $0x48] sm:$0xff]
    %v57 = vld [vmem:[#allocation5 + $0x50] sm:$0xff]
    %v58 = vld [vmem:[#allocation5 + $0x58] sm:$0xff]
    %v59 = vld [vmem:[#allocation5 + $0x60] sm:$0xff]
    %v60 = vld [vmem:[#allocation5 + $0x68] sm:$0xff]
    %v61 = vld [vmem:[#allocation5 + $0x70] sm:$0xff]
    %v62 = vld [vmem:[#allocation5 + $0x78] sm:$0xff]
    %v63 = vld [vmem:[#allocation5 + $0x80] sm:$0xff]
    %v64 = vld [vmem:[#allocation5 + $0x88] sm:$0xff]
    %v65 = vld [vmem:[#allocation5 + $0x90] sm:$0xff]
    %v66 = vld [vmem:[#allocation5 + $0x98] sm:$0xff]
    %v67 = vld [vmem:[#allocation5 + $0xa0] sm:$0xff]
    %v68 = vld [vmem:[#allocation5 + $0xa8] sm:$0xff]
    %v69 = vld [vmem:[#allocation5 + $0xb0] sm:$0xff]
    %v70 = vld [vmem:[#allocation5 + $0xb8] sm:$0xff]
    %v71 = vld [vmem:[#allocation5 + $0xc0] sm:$0xff]
    %v72 = vld [vmem:[#allocation5 + $0xc8] sm:$0xff]
    %v73 = vld [vmem:[#allocation5 + $0xd0] sm:$0xff]
    %v74 = vld [vmem:[#allocation5 + $0xd8] sm:$0xff]
    %v75 = vld [vmem:[#allocation5 + $0xe0] sm:$0xff]
    %v76 = vld [vmem:[#allocation5 + $0xe8] sm:$0xff]
    %v77 = vld [vmem:[#allocation5 + $0xf0] sm:$0xff]
    %v78 = vld [vmem:[#allocation5 + $0xf8] sm:$0xff]
    %v79 = vld [vmem:[%s2] sm:$0x1]
    %v81 = vperm.slane %v79, 0
    %83 = vmatpush.msra.mxu0 %v62
    %84 = vmatpush.msra.mxu0 %v61
    %85 = vmatpush.msra.mxu0 %v60
    %86 = vmatpush.msra.mxu0 %v59
    %87 = vmatpush.msra.mxu0 %v58
    %88 = vmatpush.msra.mxu0 %v57
    %89 = vmatpush.msra.mxu0 %v56
    %90 = vmatpush.msra.mxu0 %v55
    %91 = vmatpush.msra.mxu0 %v54
    %92 = vmatpush.msra.mxu0 %v53
    %93 = vmatpush.msra.mxu0 %v52
    %94 = vmatpush.msra.mxu0 %v51
    %95 = vmatpush.msra.mxu0 %v50
    %96 = vmatpush.msra.mxu0 %v49
    %97 = vmatpush.msra.mxu0 %v48
    %98 = vmatpush.msra.mxu0 %v47
    %99 = vmatmul.f32.gmra.mxu0 %v45
    %v100 = vpop.f32.mrf.mxu0
    %v101 = vadd.f32 %v81, %v100
    %102 = vdwg.mxu0
    %103 = vmatpush.msra.mxu0 %v78
    %104 = vmatpush.msra.mxu0 %v77
    %105 = vmatpush.msra.mxu0 %v76
    %106 = vmatpush.msra.mxu0 %v75
    %107 = vmatpush.msra.mxu0 %v74
    %108 = vmatpush.msra.mxu0 %v73
    %109 = vmatpush.msra.mxu0 %v72
    %110 = vmatpush.msra.mxu0 %v71
    %111 = vmatpush.msra.mxu0 %v70
    %112 = vmatpush.msra.mxu0 %v69
    %113 = vmatpush.msra.mxu0 %v68
    %114 = vmatpush.msra.mxu0 %v67
    %115 = vmatpush.msra.mxu0 %v66
    %116 = vmatpush.msra.mxu0 %v65
    %117 = vmatpush.msra.mxu0 %v64
    %118 = vmatpush.msra.mxu0 %v63
    %119 = vmatmul.f32.gmra.mxu0 %v46
    %v120 = vpop.f32.mrf.mxu0
    %v121 = vadd.f32 %v101, %v120
    %122 = vdwg.mxu0
    %123 = vst [vmem:[#allocation7] sm:$0xff] %v121
    // Predicated region
    $region22: #{tpu_custom_call.1} parent=1 // pred_check
      _
    $region23: #{tpu_custom_call.1} parent=1 // pred_check_branch
      %125 = sbr.rel (0) target = $region25
    $region24: #{tpu_custom_call.1} parent=1 // pred_region
      %127 = vsyncadd [#allocation4], 0
      %s129 = sshll.u32 [#allocation7], 4
      %s130 = int_to_ptr.vmem [resolvable:$true] %s129
      %s131 = sshll.u32 %s3, 4
      %s132 = int_to_ptr.hbm [resolvable:$true] %s131
      %134 = dma.vmem_to_hbm [thread:$0]  %s130, 128, %s132, [#allocation4]
    $region25: #{tpu_custom_call.1} parent=1 // pred_fallthru
      _
    // Predicated region
    $region26: #{tpu_custom_call.1} parent=1 // pred_check
      _
    $region27: #{tpu_custom_call.1} parent=1 // pred_check_branch
      %136 = sbr.rel (0) target = $region29
    $region28: #{tpu_custom_call.1} parent=1 // pred_region
      %138 = dma.done [#allocation4], 128
    $region29: #{tpu_custom_call.1} parent=1 // pred_fallthru
      _
    %139 = vsyncpa [#allocation3], 1
    %140 = vsyncpa [#allocation6], 1
    %141 = vsyncpa [#allocation4], 1

</llo_original>
